<compile_context>
chip_gen: v6e
topology: v6e:2x2x1
jax: 0.10.0
libtpu: 0.0.40
codegen_flags: <defaults>
</compile_context>

<pallas_src>
import functools

import jax
import jax.numpy as jnp
import numpy as np
from jax import lax
from jax.experimental import pallas as pl
from jax.experimental.pallas import tpu as pltpu

QMIN = 0.0
QMAX = 255.0  # quint8, 8 bits, asymmetric (per_tensor_affine), reduce_range=False


def _cdiv(a: int, b: int) -> int:
    return -(-a // b)


def _round_up(a: int, b: int) -> int:
    return _cdiv(a, b) * b


def _default_vmem_limit() -> int:
    # Generation-aware: ~96 MiB on v5e/v6e (128 MiB physical), ~48 MiB on v7x
    # (64 MiB physical) -- leaves headroom for compiler scratch / spills.
    try:
        cap = int(pltpu.get_tpu_info().vmem_capacity_bytes)
        return max(32 * 1024 * 1024, (cap * 3) // 4)
    except Exception:
        return 48 * 1024 * 1024  # conservative fallback, safe on all generations


_VMEM_LIMIT_BYTES = _default_vmem_limit()
_VMEM_BUDGET = int(0.6 * _VMEM_LIMIT_BYTES)  # per-kernel working-set target


# ----------------------------- Pallas kernels -----------------------------

def minmax_kernel(x_ref, min_ref, max_ref, vmin, vmax, *,
                  rows, tm, tiles_per_core, needs_mask):
    """Observer min/max: elementwise (8, H) running accumulators in VMEM scratch,
    scalar cross-lane reduce only on the last per-core step. Tail-only masking."""
    c = pl.program_id(0)
    i = pl.program_id(1)

    @pl.when(i == 0)
    def _():
        vmin[...] = jnp.full_like(vmin, jnp.inf)
        vmax[...] = jnp.full_like(vmax, -jnp.inf)

    x = x_ref[...]
    h = x.shape[-1]

    def accum(xm, xM):
        vmin[...] = jnp.minimum(vmin[...], jnp.min(xm.reshape(-1, 8, h), axis=0))
        vmax[...] = jnp.maximum(vmax[...], jnp.max(xM.reshape(-1, 8, h), axis=0))

    if needs_mask:
        row0 = (c * tiles_per_core + i) * tm

        @pl.when(row0 + tm <= rows)   # fast path: fully valid tile, no masking
        def _():
            accum(x, x)

        @pl.when(row0 + tm > rows)    # tail tile(s): mask padded rows
        def _():
            rids = row0 + lax.broadcasted_iota(jnp.int32, x.shape, 0)
            valid = rids < rows
            accum(jnp.where(valid, x, jnp.inf), jnp.where(valid, x, -jnp.inf))
    else:
        accum(x, x)

    @pl.when(i == tiles_per_core - 1)
    def _():
        min_ref[...] = jnp.min(vmin[...], keepdims=True)
        max_ref[...] = jnp.max(vmax[...], keepdims=True)


def fq_matmul_obs_kernel(qp_ref, x_ref, w_ref, b_ref,
                         o_ref, omin_ref, omax_ref,
                         vmin, vmax, *, rows, tm, tiles_per_core, n_col_tiles,
                         needs_mask, use_bf16_mxu):
    """Fused: input FakeQuantize -> matmul + bias -> output-observer min/max.

    bf16 MXU path uses the exact-integer trick: (xq - z) is an integer in
    [-255, 255] (lossless in bf16); the f32 scale is applied to the accumulator,
    so only the weight's bf16 cast is approximate."""
    c = pl.program_id(0)
    j = pl.program_id(1)  # column (N) tile
    i = pl.program_id(2)  # row (M) tile -- innermost

    @pl.when((j == 0) & (i == 0))
    def _():
        vmin[...] = jnp.full_like(vmin, jnp.inf)
        vmax[...] = jnp.full_like(vmax, -jnp.inf)

    inv_s = qp_ref[0]  # hoisted scalar reciprocal (no per-element divide)
    s = qp_ref[1]
    z = qp_ref[2]

    x = x_ref[...]
    xq_c = jnp.clip(jnp.round(x * inv_s + z), QMIN, QMAX) - z  # exact integers
    w = w_ref[...]
    if use_bf16_mxu:
        acc = jnp.dot(xq_c.astype(jnp.bfloat16), w.astype(jnp.bfloat16),
                      preferred_element_type=jnp.float32)
    else:
        acc = jnp.dot(xq_c, w, preferred_element_type=jnp.float32)
    y = s * acc + b_ref[...]
    o_ref[...] = y

    n = y.shape[-1]

    def accum(ym, yM):
        vmin[...] = jnp.minimum(vmin[...], jnp.min(ym.reshape(-1, 8, n), axis=0))
        vmax[...] = jnp.maximum(vmax[...], jnp.max(yM.reshape(-1, 8, n), axis=0))

    if needs_mask:
        row0 = (c * tiles_per_core + i) * tm

        @pl.when(row0 + tm <= rows)   # fast path: no iota / select on the VPU
        def _():
            accum(y, y)

        @pl.when(row0 + tm > rows)    # tail tile(s) only
        def _():
            rids = row0 + lax.broadcasted_iota(jnp.int32, y.shape, 0)
            valid = rids < rows
            accum(jnp.where(valid, y, jnp.inf), jnp.where(valid, y, -jnp.inf))
    else:
        accum(y, y)

    @pl.when((j == n_col_tiles - 1) & (i == tiles_per_core - 1))
    def _():
        omin_ref[...] = jnp.min(vmin[...], keepdims=True)
        omax_ref[...] = jnp.max(vmax[...], keepdims=True)


def fq_kernel(qp_ref, x_ref, o_ref):
    """Elementwise fake-quantize (output QuantStub); DeQuantStub is identity."""
    inv_s = qp_ref[0]
    s = qp_ref[1]
    z = qp_ref[2]
    x = x_ref[...]
    o_ref[...] = (jnp.clip(jnp.round(x * inv_s + z), QMIN, QMAX) - z) * s


# ----------------------------- tiling helpers -----------------------------

_ROW_TILE_CANDIDATES = (512, 256, 128, 64, 32, 16, 8)


def _matmul_vmem_bytes(tm, K, tn):
    # double-buffered x + w + b + y tiles, plus the (8, tn) observer scratch (x2)
    return 4 * (2 * tm * K + 2 * K * tn + 2 * tn + 2 * tm * tn + 2 * 8 * tn)


def _pick_row_tile(M, tm_max, K, tn):
    cands = [c for c in _ROW_TILE_CANDIDATES
             if c <= max(tm_max, 8) and _matmul_vmem_bytes(c, K, tn) <= _VMEM_BUDGET]
    if not cands:
        cands = [8]
    # Largest tile whose padding waste is small (<= 1/8 of the padded extent) ...
    for c in cands:
        mp = _round_up(M, c)
        if (mp - M) * 8 <= mp:
            return c
    # ... otherwise minimize padding, tie-break to the larger tile.
    return min(cands, key=lambda c: (_round_up(M, c) - M, -c))


def _pick_col_tile(N):
    if N % 128 != 0:
        # TODO(synk): pad N to a multiple of 128 in the wrapper for lane-dense
        # (unmasked vst) output stores on v5e.
        return N
    if N <= 1024:
        return N
    for cand in (1024, 512, 256, 128):
        if N % cand == 0:
            return cand
    return N


def _grow_row_tile(tm, tiles_per_core, width, bytes_per_row, cap=1024):
    """Power-of-two growth factor f (f | tiles_per_core) for a larger row tile."""
    f = 1
    while (tiles_per_core % (2 * f) == 0 and tm * 2 * f <= cap
           and bytes_per_row * tm * 2 * f * width <= _VMEM_BUDGET):
        f *= 2
    return f


# ----------------------------- Pallas wrappers -----------------------------

def tensor_minmax(x2d, *, rows, tm, num_cores, tiles_per_core, needs_mask):
    Mp, H = x2d.shape
    kern = functools.partial(minmax_kernel, rows=rows, tm=tm,
                             tiles_per_core=tiles_per_core, needs_mask=needs_mask)
    mn, mx = pl.pallas_call(
        kern,
        out_shape=(jax.ShapeDtypeStruct((num_cores, 1), jnp.float32),
                   jax.ShapeDtypeStruct((num_cores, 1), jnp.float32)),
        grid=(num_cores, tiles_per_core),
        in_specs=[pl.BlockSpec((tm, H), lambda c, i: (c * tiles_per_core + i, 0))],
        out_specs=(pl.BlockSpec((1, 1), lambda c, i: (c, 0)),
                   pl.BlockSpec((1, 1), lambda c, i: (c, 0))),
        scratch_shapes=[pltpu.VMEM((8, H), jnp.float32),
                        pltpu.VMEM((8, H), jnp.float32)],
        compiler_params=pltpu.CompilerParams(
            dimension_semantics=("parallel", "arbitrary"),
            vmem_limit_bytes=_VMEM_LIMIT_BYTES),
    )(x2d)
    # Combine the per-core partials (one per TensorCore on v7x).
    return jnp.min(mn), jnp.max(mx)


def fq_matmul_obs(x2d, w, b, qp, *, rows, tm, tn, num_cores, tiles_per_core,
                  needs_mask, use_bf16_mxu):
    Mp, K = x2d.shape
    N = w.shape[1]
    n_col_tiles = N // tn
    kern = functools.partial(fq_matmul_obs_kernel, rows=rows, tm=tm,
                             tiles_per_core=tiles_per_core, n_col_tiles=n_col_tiles,
                             needs_mask=needs_mask, use_bf16_mxu=use_bf16_mxu)
    # TODO(synk): for very large K add a K grid axis with an f32 accumulator
    # scratch, and use pipeline_mode=pl.Buffered(1) on the (constant-index)
    # weight/bias specs to cut their double-buffered VMEM in half.
    y, omn, omx = pl.pallas_call(
        kern,
        out_shape=(jax.ShapeDtypeStruct((Mp, N), jnp.float32),
                   jax.ShapeDtypeStruct((num_cores, 1), jnp.float32),
                   jax.ShapeDtypeStruct((num_cores, 1), jnp.float32)),
        grid=(num_cores, n_col_tiles, tiles_per_core),
        in_specs=[
            pl.BlockSpec(memory_space=pltpu.MemorySpace.SMEM),  # [inv_s, s, zp]
            pl.BlockSpec((tm, K), lambda c, j, i: (c * tiles_per_core + i, 0)),
            pl.BlockSpec((K, tn), lambda c, j, i: (0, j)),      # column-stationary W
            pl.BlockSpec((1, tn), lambda c, j, i: (0, j)),
        ],
        out_specs=(
            pl.BlockSpec((tm, tn), lambda c, j, i: (c * tiles_per_core + i, j)),
            pl.BlockSpec((1, 1), lambda c, j, i: (c, 0)),
            pl.BlockSpec((1, 1), lambda c, j, i: (c, 0))),
        scratch_shapes=[pltpu.VMEM((8, tn), jnp.float32),
                        pltpu.VMEM((8, tn), jnp.float32)],
        compiler_params=pltpu.CompilerParams(
            dimension_semantics=("parallel", "arbitrary", "arbitrary"),
            vmem_limit_bytes=_VMEM_LIMIT_BYTES),
    )(qp, x2d, w, b)
    return y, jnp.min(omn), jnp.max(omx)


def fake_quant(x2d, qp, *, tm):
    Mp, N = x2d.shape
    return pl.pallas_call(
        fq_kernel,
        out_shape=jax.ShapeDtypeStruct((Mp, N), jnp.float32),
        grid=(Mp // tm,),
        in_specs=[pl.BlockSpec(memory_space=pltpu.MemorySpace.SMEM),
                  pl.BlockSpec((tm, N), lambda i: (i, 0))],
        out_specs=pl.BlockSpec((tm, N), lambda i: (i, 0)),
        input_output_aliases={1: 0},  # y2d is dead after this pass: write in place
        compiler_params=pltpu.CompilerParams(
            dimension_semantics=("parallel",),
            vmem_limit_bytes=_VMEM_LIMIT_BYTES),
    )(qp, x2d)


# --------------------------- qparams (observer math) ---------------------------

def qparams(mn, mx):
    """torch MovingAverageMinMaxObserver._calculate_qparams (affine, quint8)."""
    mn = jnp.minimum(mn, 0.0)
    mx = jnp.maximum(mx, 0.0)
    scale = (mx - mn) / (QMAX - QMIN)
    scale = jnp.maximum(scale, jnp.finfo(jnp.float32).eps)
    zp = jnp.clip(QMIN - jnp.round(mn / scale), QMIN, QMAX)
    return scale.astype(jnp.float32), zp.astype(jnp.float32)


def _pack_qp(scale, zp):
    inv_s = (1.0 / scale).astype(jnp.float32)
    return jnp.stack([inv_s, scale, zp]).astype(jnp.float32)


# ----------------------------- forward pass -----------------------------

@functools.partial(jax.jit, static_argnames=("tm", "use_bf16_mxu", "return_pre_fq"))
def qat_wrapper_forward(x, w, b, tm=512, use_bf16_mxu=True, return_pre_fq=False):
    """QATWrapper.forward: QuantStub(x) -> forward_fn (x@W+b) -> QuantStub -> DeQuantStub."""
    # TODO(synk): QATWrapper wraps an arbitrary forward_fn; it is modeled here as
    # a single affine op y = x @ W + b.
    B, S, H = x.shape
    N = w.shape[1]
    M = B * S
    x2d = x.reshape(M, H).astype(jnp.float32)
    w32 = w.astype(jnp.float32)
    b2d = b.reshape(1, N).astype(jnp.float32)

    tn = _pick_col_tile(N)
    tm_eff = _pick_row_tile(M, tm, H, tn)
    n_tiles = _cdiv(M, tm_eff)
    n_cores = 2 if n_tiles >= 2 else 1       # per-core partial observers (v7x megacore)
    tpc = _cdiv(n_tiles, n_cores)            # row tiles per core
    Mp = n_cores * tpc * tm_eff
    if Mp != M:
        x2d = jnp.pad(x2d, ((0, Mp - M), (0, 0)))
    needs_mask = Mp != M

    # ---- input QuantStub (FakeQuantize): observe, compute qparams ----
    f_obs = _grow_row_tile(tm_eff, tpc, H, bytes_per_row=8)   # bigger, HBM-friendly tile
    mn_in, mx_in = tensor_minmax(
        x2d, rows=M, tm=tm_eff * f_obs, num_cores=n_cores,
        tiles_per_core=tpc // f_obs, needs_mask=needs_mask)
    s_in, z_in = qparams(mn_in, mx_in)
    qp_in = _pack_qp(s_in, z_in)

    # ---- forward_fn fused with input fake-quant and output-observer min/max ----
    y2d, mn_out, mx_out = fq_matmul_obs(
        x2d, w32, b2d, qp_in, rows=M, tm=tm_eff, tn=tn, num_cores=n_cores,
        tiles_per_core=tpc, needs_mask=needs_mask, use_bf16_mxu=use_bf16_mxu)

    # ---- output QuantStub (FakeQuantize): qparams from fused statistics ----
    s_out, z_out = qparams(mn_out, mx_out)
    qp_out = _pack_qp(s_out, z_out)
    f_fq = _grow_row_tile(tm_eff, tpc, N, bytes_per_row=16)
    y_fq = fake_quant(y2d, qp_out, tm=tm_eff * f_fq)

    # ---- output DeQuantStub: identity during QAT (already fp32) ----
    out = y_fq[:M].reshape(B, S, N)
    if return_pre_fq:
        return out, y2d[:M].reshape(B, S, N)
    return out


# ----------------------------- pure-JAX reference -----------------------------

def ref_forward(x, w, b, use_bf16_mxu=True):
    """Reference mirroring the module semantics (and the bf16 weight cast, if any)."""
    B, S, H = x.shape
    N = w.shape[1]
    x2d = x.reshape(B * S, H).astype(jnp.float32)
    b2d = b.reshape(1, N).astype(jnp.float32)

    s_in, z_in = qparams(x2d.min(), x2d.max())
    inv_in = 1.0 / s_in
    codes = jnp.clip(jnp.round(x2d * inv_in + z_in), QMIN, QMAX) - z_in
    w_eff = (w.astype(jnp.bfloat16).astype(jnp.float32) if use_bf16_mxu
             else w.astype(jnp.float32))
    y2d = s_in * jnp.dot(codes, w_eff, preferred_element_type=jnp.float32,
                         precision=lax.Precision.HIGHEST) + b2d

    s_out, z_out = qparams(y2d.min(), y2d.max())
    inv_out = 1.0 / s_out
    out = (jnp.clip(jnp.round(y2d * inv_out + z_out), QMIN, QMAX) - z_out) * s_out
    return out.reshape(B, S, N), y2d.reshape(B, S, N), s_out


# ----------------------------------- main -----------------------------------

if __name__ == "__main__":
    B, S, H, N = 2, 8, 128, 128  # batch=2, seq=8, hidden=128

    key = jax.random.PRNGKey(0)
    kx, kw, kb = jax.random.split(key, 3)
    x = jax.random.normal(kx, (B, S, H), dtype=jnp.float32)
    w = jax.random.normal(kw, (H, N), dtype=jnp.float32) * 0.05
    b = jax.random.normal(kb, (1, N), dtype=jnp.float32) * 0.1

    # 1) Strict f32-MXU path: pre-fake-quant y must match the f32 reference tightly;
    #    the final fake-quantized output must match to within one quantization step.
    out32, y32 = jax.block_until_ready(
        qat_wrapper_forward(x, w, b, use_bf16_mxu=False, return_pre_fq=True))
    ref_out32, ref_y32, step32 = ref_forward(x, w, b, use_bf16_mxu=False)
    np.testing.assert_allclose(np.asarray(y32), np.asarray(ref_y32),
                               rtol=1e-5, atol=1e-5)
    np.testing.assert_allclose(np.asarray(out32), np.asarray(ref_out32),
                               rtol=0.0, atol=float(step32) * 1.05 + 1e-6)

    # 2) Default bf16-MXU path (exact-integer trick): compare against a reference
    #    with the same bf16 weight cast; agreement within one quantization step.
    out_bf, y_bf = jax.block_until_ready(
        qat_wrapper_forward(x, w, b, return_pre_fq=True))
    ref_out_bf, ref_y_bf, step_bf = ref_forward(x, w, b, use_bf16_mxu=True)
    np.testing.assert_allclose(np.asarray(y_bf), np.asarray(ref_y_bf),
                               rtol=1e-3, atol=1e-3)
    np.testing.assert_allclose(np.asarray(out_bf), np.asarray(ref_out_bf),
                               rtol=0.0, atol=float(step_bf) * 1.05 + 1e-6)

    # 3) Multi-tile path with padded tail tiles and the 2-way per-core observer
    #    split (exercises tail-only row masking + partial min/max combine).
    x_tail = jax.random.normal(kx, (2, 24, H), dtype=jnp.float32)  # M=48, tm=16
    out_t32, y_t32 = jax.block_until_ready(
        qat_wrapper_forward(x_tail, w, b, tm=16, use_bf16_mxu=False,
                            return_pre_fq=True))
    ref_out_t32, ref_y_t32, step_t32 = ref_forward(x_tail, w, b, use_bf16_mxu=False)
    np.testing.assert_allclose(np.asarray(y_t32), np.asarray(ref_y_t32),
                               rtol=1e-5, atol=1e-5)
    np.testing.assert_allclose(np.asarray(out_t32), np.asarray(ref_out_t32),
                               rtol=0.0, atol=float(step_t32) * 1.05 + 1e-6)

    out_tbf = jax.block_until_ready(qat_wrapper_forward(x_tail, w, b, tm=16))
    ref_out_tbf, _, step_tbf = ref_forward(x_tail, w, b, use_bf16_mxu=True)
    np.testing.assert_allclose(np.asarray(out_tbf), np.asarray(ref_out_tbf),
                               rtol=0.0, atol=float(step_tbf) * 1.05 + 1e-6)

    # TODO(synk): torch MovingAverageMinMaxObserver EMA across multiple calibration
    # steps is stateful; a single forward uses the first-batch min/max as done here.
    print("KERNEL_OK")
</pallas_src>

<mosaic_0001>
module attributes {stable_mosaic.version = 11 : i64} {
  func.func @minmax_kernel(%arg0: i32, %arg1: i32, %arg2: memref<16x128xf32, #tpu.memory_space<vmem>>, %arg3: memref<1x1xf32, #tpu.memory_space<vmem>>, %arg4: memref<1x1xf32, #tpu.memory_space<vmem>>, %arg5: memref<8x128xf32, #tpu.memory_space<vmem>>, %arg6: memref<8x128xf32, #tpu.memory_space<vmem>>) attributes {dimension_semantics = [#tpu.dimension_semantics<parallel>, #tpu.dimension_semantics<arbitrary>], iteration_bounds = array<i64: 1, 1>, scalar_prefetch = 0 : i64, scratch_operands = 2 : i64, tpu.core_type = #tpu.core_type<tc>, window_params = [{transform_indices = @transform_0, window_bounds = array<i64: 16, 128>}, {transform_indices = @transform_1, window_bounds = array<i64: 1, 1>}, {transform_indices = @transform_2, window_bounds = array<i64: 1, 1>}]} {
    %c0_i32 = arith.constant 0 : i32
    %0 = arith.cmpi eq, %arg1, %c0_i32 : i32
    %1 = arith.extui %0 : i1 to i32
    %c0_i32_0 = arith.constant 0 : i32
    %2 = arith.cmpi ne, %1, %c0_i32_0 : i32
    scf.if %2 {
      %cst_13 = arith.constant 0x7F800000 : f32
      %17 = vector.broadcast %cst_13 : f32 to vector<8x128xf32>
      %c0_14 = arith.constant 0 : index
      %c0_15 = arith.constant 0 : index
      %18 = vector.load %arg5[%c0_14, %c0_15] : memref<8x128xf32, #tpu.memory_space<vmem>>, vector<8x128xf32>
      tpu.vector_store %arg5[%c0_14, %c0_15], %17 {strides = array<i32>} : memref<8x128xf32, #tpu.memory_space<vmem>>, vector<8x128xf32>,
      %cst_16 = arith.constant 0xFF800000 : f32
      %19 = vector.broadcast %cst_16 : f32 to vector<8x128xf32>
      %c0_17 = arith.constant 0 : index
      %c0_18 = arith.constant 0 : index
      %20 = vector.load %arg6[%c0_17, %c0_18] : memref<8x128xf32, #tpu.memory_space<vmem>>, vector<8x128xf32>
      tpu.vector_store %arg6[%c0_17, %c0_18], %19 {strides = array<i32>} : memref<8x128xf32, #tpu.memory_space<vmem>>, vector<8x128xf32>,
    } else {
    }
    %c0 = arith.constant 0 : index
    %c0_1 = arith.constant 0 : index
    %3 = vector.load %arg2[%c0, %c0_1] : memref<16x128xf32, #tpu.memory_space<vmem>>, vector<16x128xf32>
    %c0_2 = arith.constant 0 : index
    %c0_3 = arith.constant 0 : index
    %4 = vector.load %arg5[%c0_2, %c0_3] : memref<8x128xf32, #tpu.memory_space<vmem>>, vector<8x128xf32>
    %5 = vector.shape_cast %3 : vector<16x128xf32> to vector<2x8x128xf32>
    %cst = arith.constant dense<0x7F800000> : vector<8x128xf32>
    %6 = vector.multi_reduction <minimumf>, %5, %cst [0] : vector<2x8x128xf32> to vector<8x128xf32>
    %7 = arith.minimumf %4, %6 : vector<8x128xf32>
    %c0_4 = arith.constant 0 : index
    %c0_5 = arith.constant 0 : index
    %8 = vector.load %arg5[%c0_4, %c0_5] : memref<8x128xf32, #tpu.memory_space<vmem>>, vector<8x128xf32>
    tpu.vector_store %arg5[%c0_4, %c0_5], %7 {strides = array<i32>} : memref<8x128xf32, #tpu.memory_space<vmem>>, vector<8x128xf32>,
    %c0_6 = arith.constant 0 : index
    %c0_7 = arith.constant 0 : index
    %9 = vector.load %arg6[%c0_6, %c0_7] : memref<8x128xf32, #tpu.memory_space<vmem>>, vector<8x128xf32>
    %10 = vector.shape_cast %3 : vector<16x128xf32> to vector<2x8x128xf32>
    %cst_8 = arith.constant dense<0xFF800000> : vector<8x128xf32>
    %11 = vector.multi_reduction <maximumf>, %10, %cst_8 [0] : vector<2x8x128xf32> to vector<8x128xf32>
    %12 = arith.maximumf %9, %11 : vector<8x128xf32>
    %c0_9 = arith.constant 0 : index
    %c0_10 = arith.constant 0 : index
    %13 = vector.load %arg6[%c0_9, %c0_10] : memref<8x128xf32, #tpu.memory_space<vmem>>, vector<8x128xf32>
    tpu.vector_store %arg6[%c0_9, %c0_10], %12 {strides = array<i32>} : memref<8x128xf32, #tpu.memory_space<vmem>>, vector<8x128xf32>,
    %c0_i32_11 = arith.constant 0 : i32
    %14 = arith.cmpi eq, %arg1, %c0_i32_11 : i32
    %15 = arith.extui %14 : i1 to i32
    %c0_i32_12 = arith.constant 0 : i32
    %16 = arith.cmpi ne, %15, %c0_i32_12 : i32
    scf.if %16 {
      %c0_13 = arith.constant 0 : index
      %c0_14 = arith.constant 0 : index
      %17 = vector.load %arg5[%c0_13, %c0_14] : memref<8x128xf32, #tpu.memory_space<vmem>>, vector<8x128xf32>
      %18 = vector.shape_cast %17 : vector<8x128xf32> to vector<1x8x128xf32>
      %cst_15 = arith.constant dense<0x7F800000> : vector<1xf32>
      %19 = vector.multi_reduction <minimumf>, %18, %cst_15 [1, 2] : vector<1x8x128xf32> to vector<1xf32>
      %20 = vector.shape_cast %19 : vector<1xf32> to vector<1x1x1xf32>
      %21 = vector.extract %20[0, 0, 0] : f32 from vector<1x1x1xf32>
      %22 = vector.broadcast %21 : f32 to vector<1x1xf32>
      %c0_16 = arith.constant 0 : index
      %c0_17 = arith.constant 0 : index
      %23 = vector.load %arg3[%c0_16, %c0_17] : memref<1x1xf32, #tpu.memory_space<vmem>>, vector<1x1xf32>
      tpu.vector_store %arg3[%c0_16, %c0_17], %22 {strides = array<i32>} : memref<1x1xf32, #tpu.memory_space<vmem>>, vector<1x1xf32>,
      %c0_18 = arith.constant 0 : index
      %c0_19 = arith.constant 0 : index
      %24 = vector.load %arg6[%c0_18, %c0_19] : memref<8x128xf32, #tpu.memory_space<vmem>>, vector<8x128xf32>
      %25 = vector.shape_cast %24 : vector<8x128xf32> to vector<1x8x128xf32>
      %cst_20 = arith.constant dense<0xFF800000> : vector<1xf32>
      %26 = vector.multi_reduction <maximumf>, %25, %cst_20 [1, 2] : vector<1x8x128xf32> to vector<1xf32>
      %27 = vector.shape_cast %26 : vector<1xf32> to vector<1x1x1xf32>
      %28 = vector.extract %27[0, 0, 0] : f32 from vector<1x1x1xf32>
      %29 = vector.broadcast %28 : f32 to vector<1x1xf32>
      %c0_21 = arith.constant 0 : index
      %c0_22 = arith.constant 0 : index
      %30 = vector.load %arg4[%c0_21, %c0_22] : memref<1x1xf32, #tpu.memory_space<vmem>>, vector<1x1xf32>
      tpu.vector_store %arg4[%c0_21, %c0_22], %29 {strides = array<i32>} : memref<1x1xf32, #tpu.memory_space<vmem>>, vector<1x1xf32>,
    } else {
    }
    return
  }
  func.func @transform_0(%arg0: i32, %arg1: i32) -> (i32, i32) {
    %c1_i32 = arith.constant 1 : i32
    %0 = arith.muli %arg0, %c1_i32 : i32
    %1 = arith.addi %0, %arg1 : i32
    %c0_i32 = arith.constant 0 : i32
    %c0_i32_0 = arith.constant 0 : i32
    return %1, %c0_i32 : i32, i32
  }
  func.func @transform_1(%arg0: i32, %arg1: i32) -> (i32, i32) {
    %c0_i32 = arith.constant 0 : i32
    %c0_i32_0 = arith.constant 0 : i32
    return %arg0, %c0_i32 : i32, i32
  }
  func.func @transform_2(%arg0: i32, %arg1: i32) -> (i32, i32) {
    %c0_i32 = arith.constant 0 : i32
    %c0_i32_0 = arith.constant 0 : i32
    return %arg0, %c0_i32 : i32, i32
  }
}

module attributes {stable_mosaic.version = 11 : i64} {
  func.func @fq_matmul_obs_kernel(%arg0: i32, %arg1: i32, %arg2: i32, %arg3: memref<3xf32, #tpu.memory_space<smem>>, %arg4: memref<16x128xf32, #tpu.memory_space<vmem>>, %arg5: memref<128x128xf32, #tpu.memory_space<vmem>>, %arg6: memref<1x128xf32, #tpu.memory_space<vmem>>, %arg7: memref<16x128xf32, #tpu.memory_space<vmem>>, %arg8: memref<1x1xf32, #tpu.memory_space<vmem>>, %arg9: memref<1x1xf32, #tpu.memory_space<vmem>>, %arg10: memref<8x128xf32, #tpu.memory_space<vmem>>, %arg11: memref<8x128xf32, #tpu.memory_space<vmem>>) attributes {dimension_semantics = [#tpu.dimension_semantics<parallel>, #tpu.dimension_semantics<arbitrary>, #tpu.dimension_semantics<arbitrary>], iteration_bounds = array<i64: 1, 1, 1>, scalar_prefetch = 0 : i64, scratch_operands = 2 : i64, tpu.core_type = #tpu.core_type<tc>, window_params = [{transform_indices = @transform_0, window_bounds = array<i64: 3>}, {transform_indices = @transform_1, window_bounds = array<i64: 16, 128>}, {transform_indices = @transform_2, window_bounds = array<i64: 128, 128>}, {transform_indices = @transform_3, window_bounds = array<i64: 1, 128>}, {transform_indices = @transform_4, window_bounds = array<i64: 16, 128>}, {transform_indices = @transform_5, window_bounds = array<i64: 1, 1>}, {transform_indices = @transform_6, window_bounds = array<i64: 1, 1>}]} {
    %c0_i32 = arith.constant 0 : i32
    %0 = arith.cmpi eq, %arg1, %c0_i32 : i32
    %c0_i32_0 = arith.constant 0 : i32
    %1 = arith.cmpi eq, %arg2, %c0_i32_0 : i32
    %2 = arith.andi %0, %1 : i1
    %3 = arith.extui %2 : i1 to i32
    %c0_i32_1 = arith.constant 0 : i32
    %4 = arith.cmpi ne, %3, %c0_i32_1 : i32
    scf.if %4 {
      %cst_25 = arith.constant 0x7F800000 : f32
      %43 = vector.broadcast %cst_25 : f32 to vector<8x128xf32>
      %c0_26 = arith.constant 0 : index
      %c0_27 = arith.constant 0 : index
      %44 = vector.load %arg10[%c0_26, %c0_27] : memref<8x128xf32, #tpu.memory_space<vmem>>, vector<8x128xf32>
      tpu.vector_store %arg10[%c0_26, %c0_27], %43 {strides = array<i32>} : memref<8x128xf32, #tpu.memory_space<vmem>>, vector<8x128xf32>,
      %cst_28 = arith.constant 0xFF800000 : f32
      %45 = vector.broadcast %cst_28 : f32 to vector<8x128xf32>
      %c0_29 = arith.constant 0 : index
      %c0_30 = arith.constant 0 : index
      %46 = vector.load %arg11[%c0_29, %c0_30] : memref<8x128xf32, #tpu.memory_space<vmem>>, vector<8x128xf32>
      tpu.vector_store %arg11[%c0_29, %c0_30], %45 {strides = array<i32>} : memref<8x128xf32, #tpu.memory_space<vmem>>, vector<8x128xf32>,
    } else {
    }
    %c0 = arith.constant 0 : index
    %5 = memref.load %arg3[%c0] : memref<3xf32, #tpu.memory_space<smem>>
    %c1 = arith.constant 1 : index
    %6 = memref.load %arg3[%c1] : memref<3xf32, #tpu.memory_space<smem>>
    %c2 = arith.constant 2 : index
    %7 = memref.load %arg3[%c2] : memref<3xf32, #tpu.memory_space<smem>>
    %c0_2 = arith.constant 0 : index
    %c0_3 = arith.constant 0 : index
    %8 = vector.load %arg4[%c0_2, %c0_3] : memref<16x128xf32, #tpu.memory_space<vmem>>, vector<16x128xf32>
    %9 = vector.broadcast %5 : f32 to vector<16x128xf32>
    %10 = arith.mulf %8, %9 : vector<16x128xf32>
    %11 = vector.broadcast %7 : f32 to vector<16x128xf32>
    %12 = arith.addf %10, %11 : vector<16x128xf32>
    %13 = math.roundeven %12 : vector<16x128xf32>
    %cst = arith.constant 0.000000e+00 : f32
    %cst_4 = arith.constant 2.550000e+02 : f32
    %14 = vector.broadcast %cst : f32 to vector<16x128xf32>
    %15 = arith.maximumf %14, %13 : vector<16x128xf32>
    %16 = vector.broadcast %cst_4 : f32 to vector<16x128xf32>
    %17 = arith.minimumf %16, %15 : vector<16x128xf32>
    %18 = vector.broadcast %7 : f32 to vector<16x128xf32>
    %19 = arith.subf %17, %18 : vector<16x128xf32>
    %c0_5 = arith.constant 0 : index
    %c0_6 = arith.constant 0 : index
    %20 = vector.load %arg5[%c0_5, %c0_6] : memref<128x128xf32, #tpu.memory_space<vmem>>, vector<128x128xf32>
    %cst_7 = arith.constant dense<0.000000e+00> : vector<16x128xf32>
    %21 = tpu.matmul %19, %20, %cst_7 {dimension_numbers = #tpu.dot_dimension_numbers<[1], [0], [0], [1], [0, 0, 1, 1], [], []>} : vector<16x128xf32>, vector<128x128xf32>, vector<16x128xf32> -> vector<16x128xf32>
    %22 = vector.broadcast %6 : f32 to vector<16x128xf32>
    %23 = arith.mulf %22, %21 : vector<16x128xf32>
    %c0_8 = arith.constant 0 : index
    %c0_9 = arith.constant 0 : index
    %24 = vector.load %arg6[%c0_8, %c0_9] : memref<1x128xf32, #tpu.memory_space<vmem>>, vector<1x128xf32>
    %25 = vector.broadcast %24 : vector<1x128xf32> to vector<16x128xf32>
    %26 = arith.addf %23, %25 : vector<16x128xf32>
    %c0_10 = arith.constant 0 : index
    %c0_11 = arith.constant 0 : index
    %27 = vector.load %arg7[%c0_10, %c0_11] : memref<16x128xf32, #tpu.memory_space<vmem>>, vector<16x128xf32>
    tpu.vector_store %arg7[%c0_10, %c0_11], %26 {strides = array<i32>} : memref<16x128xf32, #tpu.memory_space<vmem>>, vector<16x128xf32>,
    %c0_12 = arith.constant 0 : index
    %c0_13 = arith.constant 0 : index
    %28 = vector.load %arg10[%c0_12, %c0_13] : memref<8x128xf32, #tpu.memory_space<vmem>>, vector<8x128xf32>
    %29 = vector.shape_cast %26 : vector<16x128xf32> to vector<2x8x128xf32>
    %cst_14 = arith.constant dense<0x7F800000> : vector<8x128xf32>
    %30 = vector.multi_reduction <minimumf>, %29, %cst_14 [0] : vector<2x8x128xf32> to vector<8x128xf32>
    %31 = arith.minimumf %28, %30 : vector<8x128xf32>
    %c0_15 = arith.constant 0 : index
    %c0_16 = arith.constant 0 : index
    %32 = vector.load %arg10[%c0_15, %c0_16] : memref<8x128xf32, #tpu.memory_space<vmem>>, vector<8x128xf32>
    tpu.vector_store %arg10[%c0_15, %c0_16], %31 {strides = array<i32>} : memref<8x128xf32, #tpu.memory_space<vmem>>, vector<8x128xf32>,
    %c0_17 = arith.constant 0 : index
    %c0_18 = arith.constant 0 : index
    %33 = vector.load %arg11[%c0_17, %c0_18] : memref<8x128xf32, #tpu.memory_space<vmem>>, vector<8x128xf32>
    %34 = vector.shape_cast %26 : vector<16x128xf32> to vector<2x8x128xf32>
    %cst_19 = arith.constant dense<0xFF800000> : vector<8x128xf32>
    %35 = vector.multi_reduction <maximumf>, %34, %cst_19 [0] : vector<2x8x128xf32> to vector<8x128xf32>
    %36 = arith.maximumf %33, %35 : vector<8x128xf32>
    %c0_20 = arith.constant 0 : index
    %c0_21 = arith.constant 0 : index
    %37 = vector.load %arg11[%c0_20, %c0_21] : memref<8x128xf32, #tpu.memory_space<vmem>>, vector<8x128xf32>
    tpu.vector_store %arg11[%c0_20, %c0_21], %36 {strides = array<i32>} : memref<8x128xf32, #tpu.memory_space<vmem>>, vector<8x128xf32>,
    %c0_i32_22 = arith.constant 0 : i32
    %38 = arith.cmpi eq, %arg1, %c0_i32_22 : i32
    %c0_i32_23 = arith.constant 0 : i32
    %39 = arith.cmpi eq, %arg2, %c0_i32_23 : i32
    %40 = arith.andi %38, %39 : i1
    %41 = arith.extui %40 : i1 to i32
    %c0_i32_24 = arith.constant 0 : i32
    %42 = arith.cmpi ne, %41, %c0_i32_24 : i32
    scf.if %42 {
      %c0_25 = arith.constant 0 : index
      %c0_26 = arith.constant 0 : index
      %43 = vector.load %arg10[%c0_25, %c0_26] : memref<8x128xf32, #tpu.memory_space<vmem>>, vector<8x128xf32>
      %44 = vector.shape_cast %43 : vector<8x128xf32> to vector<1x8x128xf32>
      %cst_27 = arith.constant dense<0x7F800000> : vector<1xf32>
      %45 = vector.multi_reduction <minimumf>, %44, %cst_27 [1, 2] : vector<1x8x128xf32> to vector<1xf32>
      %46 = vector.shape_cast %45 : vector<1xf32> to vector<1x1x1xf32>
      %47 = vector.extract %46[0, 0, 0] : f32 from vector<1x1x1xf32>
      %48 = vector.broadcast %47 : f32 to vector<1x1xf32>
      %c0_28 = arith.constant 0 : index
      %c0_29 = arith.constant 0 : index
      %49 = vector.load %arg8[%c0_28, %c0_29] : memref<1x1xf32, #tpu.memory_space<vmem>>, vector<1x1xf32>
      tpu.vector_store %arg8[%c0_28, %c0_29], %48 {strides = array<i32>} : memref<1x1xf32, #tpu.memory_space<vmem>>, vector<1x1xf32>,
      %c0_30 = arith.constant 0 : index
      %c0_31 = arith.constant 0 : index
      %50 = vector.load %arg11[%c0_30, %c0_31] : memref<8x128xf32, #tpu.memory_space<vmem>>, vector<8x128xf32>
      %51 = vector.shape_cast %50 : vector<8x128xf32> to vector<1x8x128xf32>
      %cst_32 = arith.constant dense<0xFF800000> : vector<1xf32>
      %52 = vector.multi_reduction <maximumf>, %51, %cst_32 [1, 2] : vector<1x8x128xf32> to vector<1xf32>
      %53 = vector.shape_cast %52 : vector<1xf32> to vector<1x1x1xf32>
      %54 = vector.extract %53[0, 0, 0] : f32 from vector<1x1x1xf32>
      %55 = vector.broadcast %54 : f32 to vector<1x1xf32>
      %c0_33 = arith.constant 0 : index
      %c0_34 = arith.constant 0 : index
      %56 = vector.load %arg9[%c0_33, %c0_34] : memref<1x1xf32, #tpu.memory_space<vmem>>, vector<1x1xf32>
      tpu.vector_store %arg9[%c0_33, %c0_34], %55 {strides = array<i32>} : memref<1x1xf32, #tpu.memory_space<vmem>>, vector<1x1xf32>,
    } else {
    }
    return
  }
  func.func @transform_0(%arg0: i32, %arg1: i32, %arg2: i32) -> i32 {
    %c0_i32 = arith.constant 0 : i32
    %c0_i32_0 = arith.constant 0 : i32
    return %c0_i32 : i32
  }
  func.func @transform_1(%arg0: i32, %arg1: i32, %arg2: i32) -> (i32, i32) {
    %c1_i32 = arith.constant 1 : i32
    %0 = arith.muli %arg0, %c1_i32 : i32
    %1 = arith.addi %0, %arg2 : i32
    %c0_i32 = arith.constant 0 : i32
    %c0_i32_0 = arith.constant 0 : i32
    return %1, %c0_i32 : i32, i32
  }
  func.func @transform_2(%arg0: i32, %arg1: i32, %arg2: i32) -> (i32, i32) {
    %c0_i32 = arith.constant 0 : i32
    %c0_i32_0 = arith.constant 0 : i32
    return %c0_i32, %arg1 : i32, i32
  }
  func.func @transform_3(%arg0: i32, %arg1: i32, %arg2: i32) -> (i32, i32) {
    %c0_i32 = arith.constant 0 : i32
    %c0_i32_0 = arith.constant 0 : i32
    return %c0_i32, %arg1 : i32, i32
  }
  func.func @transform_4(%arg0: i32, %arg1: i32, %arg2: i32) -> (i32, i32) {
    %c1_i32 = arith.constant 1 : i32
    %0 = arith.muli %arg0, %c1_i32 : i32
    %1 = arith.addi %0, %arg2 : i32
    %c0_i32 = arith.constant 0 : i32
    return %1, %arg1 : i32, i32
  }
  func.func @transform_5(%arg0: i32, %arg1: i32, %arg2: i32) -> (i32, i32) {
    %c0_i32 = arith.constant 0 : i32
    %c0_i32_0 = arith.constant 0 : i32
    return %arg0, %c0_i32 : i32, i32
  }
  func.func @transform_6(%arg0: i32, %arg1: i32, %arg2: i32) -> (i32, i32) {
    %c0_i32 = arith.constant 0 : i32
    %c0_i32_0 = arith.constant 0 : i32
    return %arg0, %c0_i32 : i32, i32
  }
}

module attributes {stable_mosaic.version = 11 : i64} {
  func.func @fq_kernel(%arg0: i32, %arg1: memref<3xf32, #tpu.memory_space<smem>>, %arg2: memref<16x128xf32, #tpu.memory_space<vmem>>, %arg3: memref<16x128xf32, #tpu.memory_space<vmem>>) attributes {dimension_semantics = [#tpu.dimension_semantics<parallel>], iteration_bounds = array<i64: 1>, scalar_prefetch = 0 : i64, scratch_operands = 0 : i64, tpu.core_type = #tpu.core_type<tc>, window_params = [{transform_indices = @transform_0, window_bounds = array<i64: 3>}, {transform_indices = @transform_1, window_bounds = array<i64: 16, 128>}, {transform_indices = @transform_2, window_bounds = array<i64: 16, 128>}]} {
    %c0 = arith.constant 0 : index
    %0 = memref.load %arg1[%c0] : memref<3xf32, #tpu.memory_space<smem>>
    %c1 = arith.constant 1 : index
    %1 = memref.load %arg1[%c1] : memref<3xf32, #tpu.memory_space<smem>>
    %c2 = arith.constant 2 : index
    %2 = memref.load %arg1[%c2] : memref<3xf32, #tpu.memory_space<smem>>
    %c0_0 = arith.constant 0 : index
    %c0_1 = arith.constant 0 : index
    %3 = vector.load %arg2[%c0_0, %c0_1] : memref<16x128xf32, #tpu.memory_space<vmem>>, vector<16x128xf32>
    %4 = vector.broadcast %0 : f32 to vector<16x128xf32>
    %5 = arith.mulf %3, %4 : vector<16x128xf32>
    %6 = vector.broadcast %2 : f32 to vector<16x128xf32>
    %7 = arith.addf %5, %6 : vector<16x128xf32>
    %8 = math.roundeven %7 : vector<16x128xf32>
    %cst = arith.constant 0.000000e+00 : f32
    %cst_2 = arith.constant 2.550000e+02 : f32
    %9 = vector.broadcast %cst : f32 to vector<16x128xf32>
    %10 = arith.maximumf %9, %8 : vector<16x128xf32>
    %11 = vector.broadcast %cst_2 : f32 to vector<16x128xf32>
    %12 = arith.minimumf %11, %10 : vector<16x128xf32>
    %13 = vector.broadcast %2 : f32 to vector<16x128xf32>
    %14 = arith.subf %12, %13 : vector<16x128xf32>
    %15 = vector.broadcast %1 : f32 to vector<16x128xf32>
    %16 = arith.mulf %14, %15 : vector<16x128xf32>
    %c0_3 = arith.constant 0 : index
    %c0_4 = arith.constant 0 : index
    %17 = vector.load %arg3[%c0_3, %c0_4] : memref<16x128xf32, #tpu.memory_space<vmem>>, vector<16x128xf32>
    tpu.vector_store %arg3[%c0_3, %c0_4], %16 {strides = array<i32>} : memref<16x128xf32, #tpu.memory_space<vmem>>, vector<16x128xf32>,
    return
  }
  func.func @transform_0(%arg0: i32) -> i32 {
    %c0_i32 = arith.constant 0 : i32
    %c0_i32_0 = arith.constant 0 : i32
    return %c0_i32 : i32
  }
  func.func @transform_1(%arg0: i32) -> (i32, i32) {
    %c0_i32 = arith.constant 0 : i32
    %c0_i32_0 = arith.constant 0 : i32
    return %arg0, %c0_i32 : i32, i32
  }
  func.func @transform_2(%arg0: i32) -> (i32, i32) {
    %c0_i32 = arith.constant 0 : i32
    %c0_i32_0 = arith.constant 0 : i32
    return %arg0, %c0_i32 : i32, i32
  }
}

</mosaic_0001>

<llo_original>
// kernel: qat_wrapper_forward.5
$region0: #{qat_wrapper_forward.5}
  #allocation0 [shape = 'u32[]', space=smem, size = 0x4, offset = 0x4, fixed_abs, tag = 'smem constant byte address 0x4 - core index']
  #allocation1 [shape = 'u32[144,128]{1,0:T(1,128)}', space=vmem, size = 0x12000, scoped, tag = 'internal scratch']
  %s0 = inlined_call_operand.vmem [shape: f32[3], index: 0, kind: input, shape index: {}]
  %s1 = inlined_call_operand.vmem [shape: f32[16,128], index: 1, kind: input, shape index: {}, may-alias: {1,2}]
  %s2 = inlined_call_operand.vmem [shape: f32[16,128], index: 2, kind: output, shape index: {}, may-alias: {1,2}]
  %s3 = sld [smem:[#allocation0]]
  $region22: #{qat_wrapper_forward.5} parent=0
    _
  %s5 = ssub.s32 1, %s3
  %s6 = scalar_select 0, %s5, %s3
  $region1: #{qat_wrapper_forward.5} parent=0
    #allocation2 [shape = 'u8[512]{0}', space=smem, size = 0x200, scoped, tag = 'input window, operand 0, single buffered']
    #allocation3 [shape = 's32[1]{0}', space=sflag, size = 0x4, scoped, tag = 'scoped memory for qat_wrapper_forward.5']
    %7 = vsyncpa [#allocation3], 0
    // Predicated region
    $region2: #{qat_wrapper_forward.5} parent=1 // pred_check
      _
    $region3: #{qat_wrapper_forward.5} parent=1 // pred_check_branch
      %9 = sbr.rel (0) target = $region5
    $region4: #{qat_wrapper_forward.5} parent=1 // pred_region
      %s11 = ssub.s32 16, 16
      %12 = vsyncadd [#allocation3], %s11
      %s14 = sshll.u32 %s0, 4
      %s15 = int_to_ptr.vmem [resolvable:$true] %s14
      %17 = dma.vmem_to_smem %s15, 16, [#allocation2], [#allocation3]
    $region5: #{qat_wrapper_forward.5} parent=1 // pred_fallthru
      _
    // Predicated region
    $region6: #{qat_wrapper_forward.5} parent=1 // pred_check
      _
    $region7: #{qat_wrapper_forward.5} parent=1 // pred_check_branch
      %19 = sbr.rel (0) target = $region9
    $region8: #{qat_wrapper_forward.5} parent=1 // pred_region
      _
    $region9: #{qat_wrapper_forward.5} parent=1 // pred_fallthru
      _
    // Predicated region
    $region10: #{qat_wrapper_forward.5} parent=1 // pred_check
      _
    $region11: #{qat_wrapper_forward.5} parent=1 // pred_check_branch
      %21 = sbr.rel (0) target = $region13
    $region12: #{qat_wrapper_forward.5} parent=1 // pred_region
      %22 = dma.done [#allocation3], 16
    $region13: #{qat_wrapper_forward.5} parent=1 // pred_fallthru
      _
    %23 = sfence
    %s24 = sld [smem:[#allocation2]]
    %s25 = sld [smem:[#allocation2 + $0x1]]
    %s26 = sld [smem:[#allocation2 + $0x2]]
    %v27 = vld [vmem:[%s1] sm:$0xff]
    %v28 = vld [vmem:[%s1 + $0x8] sm:$0xff]
    %v29 = vstv %s24
    %v30 = vmul.f32 %v27, %v29
    %v31 = vmul.f32 %v28, %v29
    %v32 = vstv %s26
    %v33 = vadd.f32 %v30, %v32
    %v34 = vadd.f32 %v31, %v32
    %v35 = vround.ne.pseudo %v33
    %v36 = vround.ne.pseudo %v34
    %v37 = vmax.f32 %v35, 0.0
    %v38 = vmax.f32 %v36, 0.0
    %v39 = vmin.f32 %v37, 255.0
    %v40 = vmin.f32 %v38, 255.0
    %v41 = vsub.f32 %v39, %v32
    %v42 = vsub.f32 %v40, %v32
    %v43 = vstv %s25
    %v44 = vmul.f32 %v41, %v43
    %v45 = vmul.f32 %v42, %v43
    %46 = vst [vmem:[%s2] sm:$0xff] %v44
    %47 = vst [vmem:[%s2 + $0x8] sm:$0xff] %v45
    // Predicated region
    $region14: #{qat_wrapper_forward.5} parent=1 // pred_check
      _
    $region15: #{qat_wrapper_forward.5} parent=1 // pred_check_branch
      %49 = sbr.rel (0) target = $region17
    $region16: #{qat_wrapper_forward.5} parent=1 // pred_region
      _
    $region17: #{qat_wrapper_forward.5} parent=1 // pred_fallthru
      _
    // Predicated region
    $region18: #{qat_wrapper_forward.5} parent=1 // pred_check
      _
    $region19: #{qat_wrapper_forward.5} parent=1 // pred_check_branch
      %51 = sbr.rel (0) target = $region21
    $region20: #{qat_wrapper_forward.5} parent=1 // pred_region
      _
    $region21: #{qat_wrapper_forward.5} parent=1 // pred_fallthru
      _
    %52 = vsyncpa [#allocation3], 1

// kernel: qat_wrapper_forward.3
$region0: #{qat_wrapper_forward.3}
  #allocation0 [shape = 'u32[]', space=smem, size = 0x4, offset = 0x4, fixed_abs, tag = 'smem constant byte address 0x4 - core index']
  #allocation1 [shape = 'u32[144,128]{1,0:T(1,128)}', space=vmem, size = 0x12000, scoped, tag = 'internal scratch']
  #allocation2 [shape = 'f32[8,128]{1,0:T(8,128)}', space=vmem, size = 0x1000, scoped, tag = 'scratch operand']
  #allocation3 [shape = 'f32[8,128]{1,0:T(8,128)}', space=vmem, size = 0x1000, scoped, tag = 'scratch operand']
  %s0 = inlined_call_operand.hbm [shape: f32[16,128], index: 0, kind: input, shape index: {}]
  %s1 = inlined_call_operand.hbm [shape: f32[1,1], index: 1, kind: output, shape index: {0}]
  %s2 = inlined_call_operand.hbm [shape: f32[1,1], index: 2, kind: output, shape index: {1}]
  %3 = xla_tuple %s1, %s2
  %s4 = sld [smem:[#allocation0]]
  $region34: #{qat_wrapper_forward.3} parent=0
    _
  %s6 = ssub.s32 1, %s4
  %s7 = scalar_select 0, %s6, %s4
  $region1: #{qat_wrapper_forward.3} parent=0
    #allocation4 [shape = 'u8[8192]{0}', space=vmem, size = 0x2000, scoped, tag = 'input window, operand 0, single buffered']
    #allocation5 [shape = 's32[1]{0}', space=sflag, size = 0x4, scoped, tag = 'scoped memory for qat_wrapper_forward.3']
    #allocation6 [shape = 's32[1]{0}', space=sflag, size = 0x4, scoped, tag = 'scoped memory for qat_wrapper_forward.3']
    #allocation7 [shape = 'u8[512]{0}', space=vmem, size = 0x400, scoped, tag = 'output window, operand 0, single buffered']
    #allocation8 [shape = 'u8[512]{0}', space=vmem, size = 0x400, scoped, tag = 'output window, operand 1, single buffered']
    #allocation9 [shape = 's32[1]{0}', space=sflag, size = 0x4, scoped, tag = 'scoped memory for qat_wrapper_forward.3']
    %8 = vsyncpa [#allocation5], 0
    %9 = vsyncpa [#allocation6], 0
    %10 = vsyncpa [#allocation9], 0
    // Predicated region
    $region2: #{qat_wrapper_forward.3} parent=1 // pred_check
      _
    $region3: #{qat_wrapper_forward.3} parent=1 // pred_check_branch
      %12 = sbr.rel (0) target = $region5
    $region4: #{qat_wrapper_forward.3} parent=1 // pred_region
      %s13 = sadd.s32 0, 0
      %s14 = smul.u32 2, %s13
      %s16 = ssub.s32 256, 256
      %17 = vsyncadd [#allocation5], %s16
      %s18 = smul.addr %s14, 128
      %s19 = scalar_lea.hbm %s0, %s18
      %s20 = sshll.u32 [#allocation4], 4
      %s21 = int_to_ptr.vmem [resolvable:$true] %s20
      %26 = dma.hbm_to_vmem [thread:$0]  %s19, 256, %s21, [#allocation5], 128, 128, 8
    $region5: #{qat_wrapper_forward.3} parent=1 // pred_fallthru
      _
    // Predicated region
    $region6: #{qat_wrapper_forward.3} parent=1 // pred_check
      _
    $region7: #{qat_wrapper_forward.3} parent=1 // pred_check_branch
      %28 = sbr.rel (0) target = $region9
    $region8: #{qat_wrapper_forward.3} parent=1 // pred_region
      %29 = dma.done [#allocation5], 256
    $region9: #{qat_wrapper_forward.3} parent=1 // pred_fallthru
      _
    %s30 = sadd.s32 0, 0
    %s31 = smul.u32 2, %s30
    %p32 = scmp.eq.s32.totalorder 0, 0
    // Predicated region
    $region10: #{qat_wrapper_forward.3} parent=1 // pred_check
      %p33 = pneg %p32
    $region11: #{qat_wrapper_forward.3} parent=1 // pred_check_branch
      %35 = sbr.rel (%p33) target = $region13
    $region12: #{qat_wrapper_forward.3} parent=1 // pred_region
      %36 = vst [vmem:[#allocation2] sm:$0xff] inf
      %37 = vst [vmem:[#allocation3] sm:$0xff] -inf
    $region13: #{qat_wrapper_forward.3} parent=1 // pred_fallthru
      _
    %v38 = vld [vmem:[#allocation4] sm:$0xff]
    %v39 = vld [vmem:[#allocation4 + $0x8] sm:$0xff]
    %v40 = vld [vmem:[#allocation2] sm:$0xff]
    %v41 = vmin.f32 %v38, %v39
    %v42 = vmin.f32 %v40, %v41
    %43 = vst [vmem:[#allocation2] sm:$0xff] %v42
    %v44 = vld [vmem:[#allocation3] sm:$0xff]
    %v45 = vmax.f32 %v38, %v39
    %v46 = vmax.f32 %v44, %v45
    %47 = vst [vmem:[#allocation3] sm:$0xff] %v46
    // Predicated region
    $region14: #{qat_wrapper_forward.3} parent=1 // pred_check
      %p48 = pneg %p32
    $region15: #{qat_wrapper_forward.3} parent=1 // pred_check_branch
      %50 = sbr.rel (%p48) target = $region17
    $region16: #{qat_wrapper_forward.3} parent=1 // pred_region
      %v51 = vld [vmem:[#allocation2] sm:$0xff]
      %52 = vmin.xlane.f32.xlu0 %v51
      %v53 = vpop.xlane.xlu0 %52
      %v54 = vrot.slane %v53, 4
      %v55 = vmin.f32 %v53, %v54
      %v56 = vrot.slane %v55, 2
      %v57 = vmin.f32 %v55, %v56
      %v58 = vrot.slane %v57, 1
      %v59 = vmin.f32 %v57, %v58
      %s60 = vtos %v59
      %v61 = vstv %s60
      %vm62 = vcmask 0
      %63 = vst.msk [vmem:[#allocation7] sm:$0x1] %vm62, %v61
      %v64 = vld [vmem:[#allocation3] sm:$0xff]
      %65 = vmax.xlane.f32.xlu0 %v64
      %v66 = vpop.xlane.xlu0 %65
      %v67 = vrot.slane %v66, 4
      %v68 = vmax.f32 %v66, %v67
      %v69 = vrot.slane %v68, 2
      %v70 = vmax.f32 %v68, %v69
      %v71 = vrot.slane %v70, 1
      %v72 = vmax.f32 %v70, %v71
      %s73 = vtos %v72
      %v74 = vstv %s73
      %75 = vst.msk [vmem:[#allocation8] sm:$0x1] %vm62, %v74
    $region17: #{qat_wrapper_forward.3} parent=1 // pred_fallthru
      _
    // Predicated region
    $region18: #{qat_wrapper_forward.3} parent=1 // pred_check
      _
    $region19: #{qat_wrapper_forward.3} parent=1 // pred_check_branch
      %77 = sbr.rel (0) target = $region21
    $region20: #{qat_wrapper_forward.3} parent=1 // pred_region
      %s79 = ssub.s32 16, 16
      %80 = vsyncadd [#allocation6], %s79
      %s82 = sshll.u32 [#allocation7], 4
      %s83 = int_to_ptr.vmem [resolvable:$true] %s82
      %85 = dma.vmem_to_hbm [thread:$0]  %s83, 16, %s1, [#allocation6]
    $region21: #{qat_wrapper_forward.3} parent=1 // pred_fallthru
      _
    // Predicated region
    $region22: #{qat_wrapper_forward.3} parent=1 // pred_check
      _
    $region23: #{qat_wrapper_forward.3} parent=1 // pred_check_branch
      %87 = sbr.rel (0) target = $region25
    $region24: #{qat_wrapper_forward.3} parent=1 // pred_region
      %s89 = ssub.s32 16, 16
      %90 = vsyncadd [#allocation9], %s89
      %s92 = sshll.u32 [#allocation8], 4
      %s93 = int_to_ptr.vmem [resolvable:$true] %s92
      %95 = dma.vmem_to_hbm [thread:$0]  %s93, 16, %s2, [#allocation9]
    $region25: #{qat_wrapper_forward.3} parent=1 // pred_fallthru
      _
    // Predicated region
    $region26: #{qat_wrapper_forward.3} parent=1 // pred_check
      _
    $region27: #{qat_wrapper_forward.3} parent=1 // pred_check_branch
      %97 = sbr.rel (0) target = $region29
    $region28: #{qat_wrapper_forward.3} parent=1 // pred_region
      %98 = dma.done [#allocation6], 16
    $region29: #{qat_wrapper_forward.3} parent=1 // pred_fallthru
      _
    // Predicated region
    $region30: #{qat_wrapper_forward.3} parent=1 // pred_check
      _
    $region31: #{qat_wrapper_forward.3} parent=1 // pred_check_branch
      %100 = sbr.rel (0) target = $region33
    $region32: #{qat_wrapper_forward.3} parent=1 // pred_region
      %101 = dma.done [#allocation9], 16
    $region33: #{qat_wrapper_forward.3} parent=1 // pred_fallthru
      _
    %102 = vsyncpa [#allocation5], 1
    %103 = vsyncpa [#allocation6], 1
    %104 = vsyncpa [#allocation9], 1

// kernel: qat_wrapper_forward.4
$region0: #{qat_wrapper_forward.4}
  #allocation0 [shape = 'u32[]', space=smem, size = 0x4, offset = 0x4, fixed_abs, tag = 'smem constant byte address 0x4 - core index']
  #allocation1 [shape = 'u32[144,128]{1,0:T(1,128)}', space=vmem, size = 0x12000, scoped, tag = 'internal scratch']
  #allocation2 [shape = 'f32[8,128]{1,0:T(8,128)}', space=vmem, size = 0x1000, scoped, tag = 'scratch operand']
  #allocation3 [shape = 'f32[8,128]{1,0:T(8,128)}', space=vmem, size = 0x1000, scoped, tag = 'scratch operand']
  %s0 = inlined_call_operand.vmem [shape: f32[3], index: 0, kind: input, shape index: {}]
  %s1 = inlined_call_operand.vmem [shape: f32[16,128], index: 1, kind: input, shape index: {}]
  %s2 = inlined_call_operand.hbm [shape: f32[128,128], index: 2, kind: input, shape index: {}]
  %s3 = inlined_call_operand.vmem [shape: f32[1,128], index: 3, kind: input, shape index: {}]
  %s4 = inlined_call_operand.vmem [shape: f32[16,128], index: 4, kind: output, shape index: {0}]
  %s5 = inlined_call_operand.hbm [shape: f32[1,1], index: 5, kind: output, shape index: {1}]
  %s6 = inlined_call_operand.hbm [shape: f32[1,1], index: 6, kind: output, shape index: {2}]
  %7 = xla_tuple %s4, %s5, %s6
  %s8 = sld [smem:[#allocation0]]
  $region58: #{qat_wrapper_forward.4} parent=0
    _
  %s10 = ssub.s32 1, %s8
  %s11 = scalar_select 0, %s10, %s8
  $region1: #{qat_wrapper_forward.4} parent=0
    #allocation4 [shape = 'u8[512]{0}', space=smem, size = 0x200, scoped, tag = 'input window, operand 0, single buffered']
    #allocation5 [shape = 's32[1]{0}', space=sflag, size = 0x4, scoped, tag = 'scoped memory for qat_wrapper_forward.4']
    #allocation6 [shape = 's32[1]{0}', space=sflag, size = 0x4, scoped, tag = 'scoped memory for qat_wrapper_forward.4']
    #allocation7 [shape = 's32[1]{0}', space=sflag, size = 0x4, scoped, tag = 'scoped memory for qat_wrapper_forward.4']
    #allocation8 [shape = 'u8[65536]{0}', space=vmem, size = 0x10000, scoped, tag = 'input window, operand 2, single buffered']
    #allocation9 [shape = 'u8[512]{0}', space=vmem, size = 0x400, scoped, tag = 'output window, operand 1, single buffered']
    #allocation10 [shape = 'u8[512]{0}', space=vmem, size = 0x400, scoped, tag = 'output window, operand 2, single buffered']
    #allocation11 [shape = 's32[1]{0}', space=sflag, size = 0x4, scoped, tag = 'scoped memory for qat_wrapper_forward.4']
    %12 = vsyncpa [#allocation7], 0
    %13 = vsyncpa [#allocation5], 0
    %14 = vsyncpa [#allocation6], 0
    %15 = vsyncpa [#allocation11], 0
    // Predicated region
    $region2: #{qat_wrapper_forward.4} parent=1 // pred_check
      _
    $region3: #{qat_wrapper_forward.4} parent=1 // pred_check_branch
      %17 = sbr.rel (0) target = $region5
    $region4: #{qat_wrapper_forward.4} parent=1 // pred_region
      %s19 = ssub.s32 16, 16
      %20 = vsyncadd [#allocation7], %s19
      %s22 = sshll.u32 %s0, 4
      %s23 = int_to_ptr.vmem [resolvable:$true] %s22
      %25 = dma.vmem_to_smem %s23, 16, [#allocation4], [#allocation7]
    $region5: #{qat_wrapper_forward.4} parent=1 // pred_fallthru
      _
    // Predicated region
    $region6: #{qat_wrapper_forward.4} parent=1 // pred_check
      _
    $region7: #{qat_wrapper_forward.4} parent=1 // pred_check_branch
      %27 = sbr.rel (0) target = $region9
    $region8: #{qat_wrapper_forward.4} parent=1 // pred_region
      %s28 = sadd.s32 0, 0
      %s29 = smul.u32 2, %s28
      %p30 = scmp.lt.s32.totalorder %s29, 1
      %s31 = scalar_select %p30, %s29, 1
      %s32 = smul.addr %s31, 8
      %s33 = scalar_lea.vmem %s1, %s32
      %s34 = sadd.s32 0, 0
      %s35 = smul.u32 2, %s34
    $region9: #{qat_wrapper_forward.4} parent=1 // pred_fallthru
      _
    // Predicated region
    $region10: #{qat_wrapper_forward.4} parent=1 // pred_check
      _
    $region11: #{qat_wrapper_forward.4} parent=1 // pred_check_branch
      %37 = sbr.rel (0) target = $region13
    $region12: #{qat_wrapper_forward.4} parent=1 // pred_region
      %s39 = ssub.s32 2048, 2048
      %40 = vsyncadd [#allocation5], %s39
      %s41 = sshll.u32 [#allocation8], 4
      %s42 = int_to_ptr.vmem [resolvable:$true] %s41
      %47 = dma.hbm_to_vmem [thread:$0]  %s2, 2048, %s42, [#allocation5], 128, 128, 8
    $region13: #{qat_wrapper_forward.4} parent=1 // pred_fallthru
      _
    // Predicated region
    $region14: #{qat_wrapper_forward.4} parent=1 // pred_check
      _
    $region15: #{qat_wrapper_forward.4} parent=1 // pred_check_branch
      %49 = sbr.rel (0) target = $region17
    $region16: #{qat_wrapper_forward.4} parent=1 // pred_region
      _
    $region17: #{qat_wrapper_forward.4} parent=1 // pred_fallthru
      _
    // Predicated region
    $region18: #{qat_wrapper_forward.4} parent=1 // pred_check
      _
    $region19: #{qat_wrapper_forward.4} parent=1 // pred_check_branch
      %51 = sbr.rel (0) target = $region21
    $region20: #{qat_wrapper_forward.4} parent=1 // pred_region
      %52 = dma.done [#allocation7], 16
    $region21: #{qat_wrapper_forward.4} parent=1 // pred_fallthru
      _
    // Predicated region
    $region22: #{qat_wrapper_forward.4} parent=1 // pred_check
      _
    $region23: #{qat_wrapper_forward.4} parent=1 // pred_check_branch
      %54 = sbr.rel (0) target = $region25
    $region24: #{qat_wrapper_forward.4} parent=1 // pred_region
      %55 = dma.done [#allocation5], 2048
    $region25: #{qat_wrapper_forward.4} parent=1 // pred_fallthru
      _
    %56 = sfence
    %s57 = sadd.s32 0, 0
    %s58 = smul.u32 2, %s57
    %p59 = scmp.lt.s32.totalorder %s58, 1
    %s60 = scalar_select %p59, %s58, 1
    %s61 = smul.addr %s60, 8
    %s62 = scalar_lea.vmem %s1, %s61
    %s63 = sadd.s32 0, 0
    %s64 = smul.u32 2, %s63
    %p65 = scmp.lt.s32.totalorder %s64, 1
    %s66 = scalar_select %p65, %s64, 1
    %s67 = smul.addr %s66, 8
    %s68 = scalar_lea.vmem %s4, %s67
    %s69 = sadd.s32 0, 0
    %s70 = smul.u32 2, %s69
    %p71 = scmp.lt.s32.totalorder %s70, 1
    %s72 = scalar_select %p71, %s70, 1
    %s73 = smul.addr %s72, 8
    %s74 = scalar_lea.vmem %s1, %s73
    %s75 = sadd.s32 0, 0
    %s76 = smul.u32 2, %s75
    %s77 = sadd.s32 0, 0
    %s78 = smul.u32 2, %s77
    %p79 = scmp.lt.s32.totalorder %s78, 1
    %s80 = scalar_select %p79, %s78, 1
    %s81 = smul.addr %s80, 8
    %s82 = scalar_lea.vmem %s4, %s81
    %s83 = sadd.s32 0, 0
    %s84 = smul.u32 2, %s83
    %p85 = scmp.eq.s32.totalorder 0, 0
    %p86 = scmp.eq.s32.totalorder 0, 0
    %p87 = pnand %p85, %p86
    %p88 = pneg %p87
    // Predicated region
    $region26: #{qat_wrapper_forward.4} parent=1 // pred_check
      _
    $region27: #{qat_wrapper_forward.4} parent=1 // pred_check_branch
      %90 = sbr.rel (%p87) target = $region29
    $region28: #{qat_wrapper_forward.4} parent=1 // pred_region
      %91 = vst [vmem:[#allocation2] sm:$0xff] inf
      %92 = vst [vmem:[#allocation3] sm:$0xff] -inf
    $region29: #{qat_wrapper_forward.4} parent=1 // pred_fallthru
      _
    %s93 = sld [smem:[#allocation4]]
    %s94 = sld [smem:[#allocation4 + $0x1]]
    %s95 = sld [smem:[#allocation4 + $0x2]]
    %v96 = vld [vmem:[%s74] sm:$0xff]
    %v97 = vld [vmem:[%s74 + $0x8] sm:$0xff]
    %v98 = vstv %s93
    %v99 = vmul.f32 %v96, %v98
    %v100 = vmul.f32 %v97, %v98
    %v101 = vstv %s95
    %v102 = vadd.f32 %v99, %v101
    %v103 = vadd.f32 %v100, %v101
    %v104 = vround.ne.pseudo %v102
    %v105 = vround.ne.pseudo %v103
    %v106 = vmax.f32 %v104, 0.0
    %v107 = vmax.f32 %v105, 0.0
    %v108 = vmin.f32 %v106, 255.0
    %v109 = vmin.f32 %v107, 255.0
    %v110 = vsub.f32 %v108, %v101
    %v111 = vsub.f32 %v109, %v101
    %v112 = vld [vmem:[#allocation8] sm:$0xff]
    %v113 = vld [vmem:[#allocation8 + $0x8] sm:$0xff]
    %v114 = vld [vmem:[#allocation8 + $0x10] sm:$0xff]
    %v115 = vld [vmem:[#allocation8 + $0x18] sm:$0xff]
    %v116 = vld [vmem:[#allocation8 + $0x20] sm:$0xff]
    %v117 = vld [vmem:[#allocation8 + $0x28] sm:$0xff]
    %v118 = vld [vmem:[#allocation8 + $0x30] sm:$0xff]
    %v119 = vld [vmem:[#allocation8 + $0x38] sm:$0xff]
    %v120 = vld [vmem:[#allocation8 + $0x40] sm:$0xff]
    %v121 = vld [vmem:[#allocation8 + $0x48] sm:$0xff]
    %v122 = vld [vmem:[#allocation8 + $0x50] sm:$0xff]
    %v123 = vld [vmem:[#allocation8 + $0x58] sm:$0xff]
    %v124 = vld [vmem:[#allocation8 + $0x60] sm:$0xff]
    %v125 = vld [vmem:[#allocation8 + $0x68] sm:$0xff]
    %v126 = vld [vmem:[#allocation8 + $0x70] sm:$0xff]
    %v127 = vld [vmem:[#allocation8 + $0x78] sm:$0xff]
    %128 = vmatprep.subr.mxu0 0.0
    %129 = vmatpush1.msra.mxu0 %v127
    %130 = vmatprep.subr.mxu0 0.0
    %131 = vmatpush1.msra.mxu0 %v126
    %132 = vmatprep.subr.mxu0 0.0
    %133 = vmatpush1.msra.mxu0 %v125
    %134 = vmatprep.subr.mxu0 0.0
    %135 = vmatpush1.msra.mxu0 %v124
    %136 = vmatprep.subr.mxu0 0.0
    %137 = vmatpush1.msra.mxu0 %v123
    %138 = vmatprep.subr.mxu0 0.0
    %139 = vmatpush1.msra.mxu0 %v122
    %140 = vmatprep.subr.mxu0 0.0
    %141 = vmatpush1.msra.mxu0 %v121
    %142 = vmatprep.subr.mxu0 0.0
    %143 = vmatpush1.msra.mxu0 %v120
    %144 = vmatprep.subr.mxu0 0.0
    %145 = vmatpush1.msra.mxu0 %v119
    %146 = vmatprep.subr.mxu0 0.0
    %147 = vmatpush1.msra.mxu0 %v118
    %148 = vmatprep.subr.mxu0 0.0
    %149 = vmatpush1.msra.mxu0 %v117
    %150 = vmatprep.subr.mxu0 0.0
    %151 = vmatpush1.msra.mxu0 %v116
    %152 = vmatprep.subr.mxu0 0.0
    %153 = vmatpush1.msra.mxu0 %v115
    %154 = vmatprep.subr.mxu0 0.0
    %155 = vmatpush1.msra.mxu0 %v114
    %156 = vmatprep.subr.mxu0 0.0
    %157 = vmatpush1.msra.mxu0 %v113
    %158 = vmatprep.subr.mxu0 0.0
    %159 = vmatpush1.msra.mxu0 %v112
    %160 = vmatprep.subr.mxu0 0.0
    %161 = vmatpush2.msra.mxu0 0.0
    %162 = vmatprep.subr.mxu0 0.0
    %163 = vmatpush2.msra.mxu0 0.0
    %164 = vmatprep.subr.mxu0 0.0
    %165 = vmatpush2.msra.mxu0 0.0
    %166 = vmatprep.subr.mxu0 0.0
    %167 = vmatpush2.msra.mxu0 0.0
    %168 = vmatprep.subr.mxu0 0.0
    %169 = vmatpush2.msra.mxu0 0.0
    %170 = vmatprep.subr.mxu0 0.0
    %171 = vmatpush2.msra.mxu0 0.0
    %172 = vmatprep.subr.mxu0 0.0
    %173 = vmatpush2.msra.mxu0 0.0
    %174 = vmatprep.subr.mxu0 0.0
    %175 = vmatpush2.msra.mxu0 0.0
    %176 = vmatprep.subr.mxu0 0.0
    %177 = vmatpush2.msra.mxu0 0.0
    %178 = vmatprep.subr.mxu0 0.0
    %179 = vmatpush2.msra.mxu0 0.0
    %180 = vmatprep.subr.mxu0 0.0
    %181 = vmatpush2.msra.mxu0 0.0
    %182 = vmatprep.subr.mxu0 0.0
    %183 = vmatpush2.msra.mxu0 0.0
    %184 = vmatprep.subr.mxu0 0.0
    %185 = vmatpush2.msra.mxu0 0.0
    %186 = vmatprep.subr.mxu0 0.0
    %187 = vmatpush2.msra.mxu0 0.0
    %188 = vmatprep.subr.mxu0 0.0
    %189 = vmatpush2.msra.mxu0 0.0
    %190 = vmatprep.subr.mxu0 0.0
    %191 = vmatpush2.msra.mxu0 0.0
    %192 = vmatprep.mubr.f32.mxu0 0.0
    %193 = vmatmul.mubr.f32.gmra.mxu0 %v110
    %v194 = vpop.f32.mrf.mxu0
    %v195 = vadd.f32 0.0, %v194
    %v196 = vpop.f32.mrf.mxu0
    %197 = vmatprep.mubr.f32.mxu0 0.0
    %198 = vmatmul.mubr.f32.gmra.mxu0 %v111
    %v199 = vpop.f32.mrf.mxu0
    %v200 = vadd.f32 0.0, %v199
    %v201 = vpop.f32.mrf.mxu0
    %202 = vdwg.mxu0
    %v203 = vstv %s94
    %v204 = vmul.f32 %v203, %v195
    %v205 = vmul.f32 %v203, %v200
    %v206 = vld [vmem:[%s3] sm:$0x1]
    %v208 = vlaneseq
    %v209 = vshrl.u32 %v208, 7
    %v210 = vsub.s32 0, %v209
    %v211 = vrot.slane %v206, %v210
    %v213 = vadd.f32 %v204, %v211
    %v214 = vadd.f32 %v205, %v211
    %215 = vst [vmem:[%s82] sm:$0xff] %v213
    %216 = vst [vmem:[%s82 + $0x8] sm:$0xff] %v214
    %v217 = vld [vmem:[#allocation2] sm:$0xff]
    %v218 = vmin.f32 %v213, %v214
    %v219 = vmin.f32 %v217, %v218
    %220 = vst [vmem:[#allocation2] sm:$0xff] %v219
    %v221 = vld [vmem:[#allocation3] sm:$0xff]
    %v222 = vmax.f32 %v213, %v214
    %v223 = vmax.f32 %v221, %v222
    %224 = vst [vmem:[#allocation3] sm:$0xff] %v223
    // Predicated region
    $region30: #{qat_wrapper_forward.4} parent=1 // pred_check
      _
    $region31: #{qat_wrapper_forward.4} parent=1 // pred_check_branch
      %226 = sbr.rel (%p87) target = $region33
    $region32: #{qat_wrapper_forward.4} parent=1 // pred_region
      %v227 = vld [vmem:[#allocation2] sm:$0xff]
      %228 = vmin.xlane.f32.xlu0 %v227
      %v229 = vpop.xlane.xlu0 %228
      %v230 = vrot.slane %v229, 4
      %v231 = vmin.f32 %v229, %v230
      %v232 = vrot.slane %v231, 2
      %v233 = vmin.f32 %v231, %v232
      %v234 = vrot.slane %v233, 1
      %v235 = vmin.f32 %v233, %v234
      %s236 = vtos %v235
      %v237 = vstv %s236
      %vm238 = vcmask 0
      %239 = vst.msk [vmem:[#allocation9] sm:$0x1] %vm238, %v237
      %v240 = vld [vmem:[#allocation3] sm:$0xff]
      %241 = vmax.xlane.f32.xlu0 %v240
      %v242 = vpop.xlane.xlu0 %241
      %v243 = vrot.slane %v242, 4
      %v244 = vmax.f32 %v242, %v243
      %v245 = vrot.slane %v244, 2
      %v246 = vmax.f32 %v244, %v245
      %v247 = vrot.slane %v246, 1
      %v248 = vmax.f32 %v246, %v247
      %s249 = vtos %v248
      %v250 = vstv %s249
      %251 = vst.msk [vmem:[#allocation10] sm:$0x1] %vm238, %v250
    $region33: #{qat_wrapper_forward.4} parent=1 // pred_fallthru
      _
    %s252 = sadd.s32 0, 0
    %s253 = smul.u32 2, %s252
    %p254 = scmp.lt.s32.totalorder %s253, 1
    %s255 = scalar_select %p254, %s253, 1
    %s256 = smul.addr %s255, 8
    %s257 = scalar_lea.vmem %s4, %s256
    // Predicated region
    $region34: #{qat_wrapper_forward.4} parent=1 // pred_check
      _
    $region35: #{qat_wrapper_forward.4} parent=1 // pred_check_branch
      %259 = sbr.rel (0) target = $region37
    $region36: #{qat_wrapper_forward.4} parent=1 // pred_region
      %s260 = sadd.s32 0, 0
      %s261 = smul.u32 2, %s260
    $region37: #{qat_wrapper_forward.4} parent=1 // pred_fallthru
      _
    // Predicated region
    $region38: #{qat_wrapper_forward.4} parent=1 // pred_check
      _
    $region39: #{qat_wrapper_forward.4} parent=1 // pred_check_branch
      %263 = sbr.rel (0) target = $region41
    $region40: #{qat_wrapper_forward.4} parent=1 // pred_region
      %s265 = ssub.s32 16, 16
      %266 = vsyncadd [#allocation6], %s265
      %s268 = sshll.u32 [#allocation9], 4
      %s269 = int_to_ptr.vmem [resolvable:$true] %s268
      %271 = dma.vmem_to_hbm [thread:$0]  %s269, 16, %s5, [#allocation6]
    $region41: #{qat_wrapper_forward.4} parent=1 // pred_fallthru
      _
    // Predicated region
    $region42: #{qat_wrapper_forward.4} parent=1 // pred_check
      _
    $region43: #{qat_wrapper_forward.4} parent=1 // pred_check_branch
      %273 = sbr.rel (0) target = $region45
    $region44: #{qat_wrapper_forward.4} parent=1 // pred_region
      %s275 = ssub.s32 16, 16
      %276 = vsyncadd [#allocation11], %s275
      %s278 = sshll.u32 [#allocation10], 4
      %s279 = int_to_ptr.vmem [resolvable:$true] %s278
      %281 = dma.vmem_to_hbm [thread:$0]  %s279, 16, %s6, [#allocation11]
    $region45: #{qat_wrapper_forward.4} parent=1 // pred_fallthru
      _
    // Predicated region
    $region46: #{qat_wrapper_forward.4} parent=1 // pred_check
      _
    $region47: #{qat_wrapper_forward.4} parent=1 // pred_check_branch
      %283 = sbr.rel (0) target = $region49
    $region48: #{qat_wrapper_forward.4} parent=1 // pred_region
      %s284 = sadd.s32 0, 0
      %s285 = smul.u32 2, %s284
      %p286 = scmp.lt.s32.totalorder %s285, 1
      %s287 = scalar_select %p286, %s285, 1
      %s288 = smul.addr %s287, 8
      %s289 = scalar_lea.vmem %s4, %s288
    $region49: #{qat_wrapper_forward.4} parent=1 // pred_fallthru
      _
    // Predicated region
    $region50: #{qat_wrapper_forward.4} parent=1 // pred_check
      _
    $region51: #{qat_wrapper_forward.4} parent=1 // pred_check_branch
      %291 = sbr.rel (0) target = $region53
    $region52: #{qat_wrapper_forward.4} parent=1 // pred_region
      %292 = dma.done [#allocation6], 16
    $region53: #{qat_wrapper_forward.4} parent=1 // pred_fallthru
      _
    // Predicated region
    $region54: #{qat_wrapper_forward.4} parent=1 // pred_check
      _
    $region55: #{qat_wrapper_forward.4} parent=1 // pred_check_branch
      %294 = sbr.rel (0) target = $region57
    $region56: #{qat_wrapper_forward.4} parent=1 // pred_region
      %295 = dma.done [#allocation11], 16
    $region57: #{qat_wrapper_forward.4} parent=1 // pred_fallthru
      _
    %296 = vsyncpa [#allocation5], 1
    %297 = vsyncpa [#allocation6], 1
    %298 = vsyncpa [#allocation11], 1
    %299 = vsyncpa [#allocation7], 1

</llo_original>
